<compile_context>
chip_gen: v6e
topology: v6e:2x2x1
jax: 0.10.0
libtpu: 0.0.40
codegen_flags: <defaults>
</compile_context>

<pallas_src>
import functools

import jax
import jax.numpy as jnp
from jax import lax
from jax.experimental import pallas as pl
from jax.experimental.pallas import tpu as pltpu


def _vq_kernel(x_ref, w_ref, wn_ref,                       # inputs
               quant_ref, idx_ref, enc_ref, scal_ref,      # outputs
               hist_ref, sqacc_ref,                        # scratch
               *, n_valid, batch, seq, commitment_cost, need_mask):
    i = pl.program_id(0)
    last = pl.num_programs(0) - 1

    @pl.when(i == 0)
    def _init():
        hist_ref[...] = jnp.zeros_like(hist_ref)
        sqacc_ref[...] = jnp.zeros_like(sqacc_ref)

    x = x_ref[...].astype(jnp.float32)                      # (TN, D)
    tn, d = x.shape
    k = w_ref.shape[0]

    # cosine "distances" = F.normalize(x) @ F.normalize(W).T  (eps = 1e-12).
    # The codebook is normalized once in the wrapper; only x rows here.
    inv_norm = lax.rsqrt(jnp.maximum(
        jnp.sum(x * x, axis=-1, keepdims=True), 1e-24))     # == 1 / max(||x||, 1e-12)
    x_n = x * inv_norm
    distances = lax.dot_general(
        x_n, wn_ref[...].astype(jnp.float32),
        dimension_numbers=(((1,), (1,)), ((), ())),
        preferred_element_type=jnp.float32)                 # (TN, K)

    # argmax over the codebook axis (first index on ties, like torch.argmax).
    max_d = jnp.max(distances, axis=-1, keepdims=True)      # (TN, 1)
    col = lax.broadcasted_iota(jnp.int32, (tn, k), 1)
    idx = jnp.min(jnp.where(distances >= max_d, col, k),
                  axis=-1, keepdims=True)                   # (TN, 1) int32

    # exact 0/1 one-hot -> MXU row lookup (f32 x f32 keeps codebook rows exact).
    enc = (col == idx).astype(jnp.float32)                  # (TN, K)
    quant = jnp.dot(enc, w_ref[...].astype(jnp.float32),
                    preferred_element_type=jnp.float32)     # (TN, D)

    quant_ref[...] = quant.astype(quant_ref.dtype)
    idx_ref[...] = idx
    enc_ref[...] = enc.astype(enc_ref.dtype)                # lane-dense (K) store

    # this tile's contribution to sum((quant - x)^2) and to the (S, K) histogram
    # (mask only if the batch axis was padded up to a whole number of tiles).
    diff = quant - x
    sq = diff * diff
    if need_mask:
        rows = lax.broadcasted_iota(jnp.int32, (tn, 1), 0) + i * tn
        valid = (rows < n_valid).astype(jnp.float32)        # (TN, 1)
        sq = sq * valid
        enc = enc * valid
    sqacc_ref[...] += jnp.sum(sq, axis=0, keepdims=True)    # (1, D) lane accumulator
    hist_ref[...] += jnp.sum(enc.reshape(tn // seq, seq, k), axis=0)

    @pl.when(i == last)
    def _finalize():
        mse = (jnp.sum(sqacc_ref[...], axis=-1, keepdims=True)
               * (1.0 / float(n_valid * d)))                 # (1, 1)
        scal_ref[0] = mse[0, 0]                              # q_latent_loss
        scal_ref[1] = commitment_cost * mse[0, 0]            # e_latent_loss
        # perplexity, torch 3-D path semantics: mean over the *batch* axis only
        # -> (S, K) probs, entropy summed over both S and K.
        avg = hist_ref[...] * (1.0 / float(batch))
        ent = avg * jnp.log(avg + 1e-10)
        tot = jnp.sum(jnp.sum(ent, axis=-1, keepdims=True), axis=0, keepdims=True)
        perp = jnp.exp(-tot)                                 # (1, 1)
        scal_ref[2] = perp[0, 0]


def vector_quantizer(inputs, weight, commitment_cost=0.25, batches_per_tile=None):
    """Forward pass of VectorQuantizer (cos distance, 3-D input => eval mode)."""
    bsz, seq, dim = inputs.shape
    k = weight.shape[0]
    n = bsz * seq

    # --- row-tile sizing: TN = TB * S (whole batch items per tile so the (S, K)
    # histogram update is a static reshape + sum). Keep the ~10 live (TN, K) f32
    # temporaries (distances / iota / one-hot + double-buffered one-hot output)
    # around 20 MiB so every generation's scoped VMEM is safe, while using >=512
    # rows when possible to amortize the ~0.35us/step grid overhead.
    if batches_per_tile is None:
        rows_budget = max(seq, (512 * 1024) // max(1, k))   # TN*K <= ~512K f32 elems
        batches_per_tile = max(1, min(1024, rows_budget) // seq)
    tb = max(1, min(bsz, int(batches_per_tile)))
    # sublane constraint: TN must be a multiple of 8 or equal the full row count.
    while (tb * seq) % 8 != 0 and tb < bsz:
        tb += 1
    if (tb * seq) % 8 != 0:
        tb = bsz
    g = pl.cdiv(bsz, tb)
    b_pad = g * tb
    tn = tb * seq
    n_pad = b_pad * seq

    x3 = inputs
    if b_pad != bsz:
        x3 = jnp.concatenate(
            [inputs, jnp.zeros((b_pad - bsz, seq, dim), inputs.dtype)], axis=0)
    x2d = x3.reshape(n_pad, dim)                  # native dtype, no wrapper upcast

    # normalize the codebook ONCE (plain XLA); resident in VMEM for every tile.
    w_f32 = weight.astype(jnp.float32)
    w_norm = w_f32 / jnp.maximum(
        jnp.sqrt(jnp.sum(w_f32 * w_f32, axis=-1, keepdims=True)), 1e-12)

    kernel = functools.partial(
        _vq_kernel, n_valid=n, batch=bsz, seq=seq,
        commitment_cost=float(commitment_cost), need_mask=(n_pad != n))

    quant2d, idx2d, enc2d, scal = pl.pallas_call(
        kernel,
        grid=(g,),
        in_specs=[
            pl.BlockSpec((tn, dim), lambda i: (i, 0)),   # x rows (pipelined)
            pl.BlockSpec((k, dim), lambda i: (0, 0)),    # raw codebook, resident
            pl.BlockSpec((k, dim), lambda i: (0, 0)),    # normalized codebook, resident
        ],
        out_specs=[
            pl.BlockSpec((tn, dim), lambda i: (i, 0)),   # quantized rows
            pl.BlockSpec((tn, 1), lambda i: (i, 0)),     # encoding indices
            pl.BlockSpec((tn, k), lambda i: (i, 0)),     # one-hot encodings (lane-dense)
            pl.BlockSpec(memory_space=pltpu.SMEM),       # [qloss, eloss, perplexity]
        ],
        out_shape=(
            jax.ShapeDtypeStruct((n_pad, dim), inputs.dtype),
            jax.ShapeDtypeStruct((n_pad, 1), jnp.int32),
            jax.ShapeDtypeStruct((n_pad, k), jnp.float32),
            jax.ShapeDtypeStruct((3,), jnp.float32),
        ),
        scratch_shapes=[
            pltpu.VMEM((seq, k), jnp.float32),           # per-position code histogram
            pltpu.VMEM((1, dim), jnp.float32),           # running sum((quant - x)^2)
        ],
        compiler_params=pltpu.CompilerParams(
            # the single grid axis carries the loss/histogram accumulation, so it
            # must stay "arbitrary"; tiles fit the scoped VMEM of all generations.
            dimension_semantics=("arbitrary",),
            vmem_limit_bytes=32 * 1024 * 1024,
        ),
    )(x2d, weight, w_norm)

    quant3 = quant2d[:n].reshape(bsz, seq, dim)
    idx3 = idx2d[:n].reshape(bsz, seq, 1)
    min_enc = enc2d[:n].reshape(bsz, seq, k)             # written by the kernel

    # straight-through estimator: inputs + (quantized - inputs).detach()
    quantized = inputs + lax.stop_gradient(quant3.astype(inputs.dtype) - inputs)

    # TODO(synk): training-only branches (codebook anchor re-init via FeaturePool,
    # embed_prob EMA, contrastive loss) are skipped: the 3-D input path calls
    # self.eval() before the `if self.training:` block, so they never execute.
    return {
        "quantized_latents": quantized,
        "encoding_indices": idx3,          # int32 (torch uses int64)
        "q_latent_loss": scal[0],
        "e_latent_loss": scal[1],          # already scaled by commitment_cost
        "contrastive_loss": 0.0,
        "perplexity": scal[2],
        "min_encodings": min_enc,
    }


if __name__ == "__main__":
    key = jax.random.PRNGKey(0)
    k_in, k_w = jax.random.split(key)

    B, S, D, K = 2, 8, 32, 128   # batch, seq, embedding_dim, num_embeddings
    inputs = jax.random.normal(k_in, (B, S, D), dtype=jnp.float32)
    # nn.Embedding weight init: uniform(-1/num_embeddings, 1/num_embeddings)
    weight = jax.random.uniform(k_w, (K, D), dtype=jnp.float32,
                                minval=-1.0 / K, maxval=1.0 / K)

    # batches_per_tile=1 -> a 2-step grid, exercising the pipelined/accumulating path.
    out = vector_quantizer(inputs, weight, commitment_cost=0.25, batches_per_tile=1)
    jax.block_until_ready(out)
    print("KERNEL_OK")
</pallas_src>

<mosaic_0001>
module attributes {stable_mosaic.version = 11 : i64} {
  func.func @_vq_kernel(%arg0: i32, %arg1: memref<8x32xf32, #tpu.memory_space<vmem>>, %arg2: memref<128x32xf32, #tpu.memory_space<vmem>>, %arg3: memref<128x32xf32, #tpu.memory_space<vmem>>, %arg4: memref<8x32xf32, #tpu.memory_space<vmem>>, %arg5: memref<8x1xi32, #tpu.memory_space<vmem>>, %arg6: memref<8x128xf32, #tpu.memory_space<vmem>>, %arg7: memref<3xf32, #tpu.memory_space<smem>>, %arg8: memref<8x128xf32, #tpu.memory_space<vmem>>, %arg9: memref<1x32xf32, #tpu.memory_space<vmem>>) attributes {dimension_semantics = [#tpu.dimension_semantics<arbitrary>], iteration_bounds = array<i64: 2>, scalar_prefetch = 0 : i64, scratch_operands = 2 : i64, tpu.core_type = #tpu.core_type<tc>, window_params = [{transform_indices = @transform_0, window_bounds = array<i64: 8, 32>}, {pipeline_mode = #tpu.pipeline_mode<synchronous>, transform_indices = @transform_1, window_bounds = array<i64: 128, 32>}, {pipeline_mode = #tpu.pipeline_mode<synchronous>, transform_indices = @transform_2, window_bounds = array<i64: 128, 32>}, {transform_indices = @transform_3, window_bounds = array<i64: 8, 32>}, {transform_indices = @transform_4, window_bounds = array<i64: 8, 1>}, {transform_indices = @transform_5, window_bounds = array<i64: 8, 128>}, {transform_indices = @transform_6, window_bounds = array<i64: 3>}]} {
    %c0_i32 = arith.constant 0 : i32
    %0 = arith.cmpi eq, %arg0, %c0_i32 : i32
    %1 = arith.extui %0 : i1 to i32
    %c0_i32_0 = arith.constant 0 : i32
    %2 = arith.cmpi ne, %1, %c0_i32_0 : i32
    scf.if %2 {
      %cst_28 = arith.constant 0.000000e+00 : f32
      %47 = vector.broadcast %cst_28 : f32 to vector<8x128xf32>
      %c0_29 = arith.constant 0 : index
      %c0_30 = arith.constant 0 : index
      %48 = vector.load %arg8[%c0_29, %c0_30] : memref<8x128xf32, #tpu.memory_space<vmem>>, vector<8x128xf32>
      tpu.vector_store %arg8[%c0_29, %c0_30], %47 {strides = array<i32>} : memref<8x128xf32, #tpu.memory_space<vmem>>, vector<8x128xf32>,
      %cst_31 = arith.constant 0.000000e+00 : f32
      %49 = vector.broadcast %cst_31 : f32 to vector<1x32xf32>
      %c0_32 = arith.constant 0 : index
      %c0_33 = arith.constant 0 : index
      %50 = vector.load %arg9[%c0_32, %c0_33] : memref<1x32xf32, #tpu.memory_space<vmem>>, vector<1x32xf32>
      tpu.vector_store %arg9[%c0_32, %c0_33], %49 {strides = array<i32>} : memref<1x32xf32, #tpu.memory_space<vmem>>, vector<1x32xf32>,
    } else {
    }
    %c0 = arith.constant 0 : index
    %c0_1 = arith.constant 0 : index
    %3 = vector.load %arg1[%c0, %c0_1] : memref<8x32xf32, #tpu.memory_space<vmem>>, vector<8x32xf32>
    %4 = arith.mulf %3, %3 : vector<8x32xf32>
    %cst = arith.constant dense<0.000000e+00> : vector<8xf32>
    %5 = vector.multi_reduction <add>, %4, %cst [1] : vector<8x32xf32> to vector<8xf32>
    %6 = vector.shape_cast %5 : vector<8xf32> to vector<8x1xf32>
    %cst_2 = arith.constant 1.000000e-24 : f32
    %7 = vector.broadcast %cst_2 : f32 to vector<8x1xf32>
    %8 = arith.maximumf %6, %7 : vector<8x1xf32>
    %9 = math.rsqrt %8 : vector<8x1xf32>
    %10 = vector.broadcast %9 : vector<8x1xf32> to vector<8x32xf32>
    %11 = arith.mulf %3, %10 : vector<8x32xf32>
    %c0_3 = arith.constant 0 : index
    %c0_4 = arith.constant 0 : index
    %12 = vector.load %arg3[%c0_3, %c0_4] : memref<128x32xf32, #tpu.memory_space<vmem>>, vector<128x32xf32>
    %cst_5 = arith.constant dense<0.000000e+00> : vector<8x128xf32>
    %13 = tpu.matmul %11, %12, %cst_5 {dimension_numbers = #tpu.dot_dimension_numbers<[1], [1], [0], [0], [0, 0, 1, 0], [], []>} : vector<8x32xf32>, vector<128x32xf32>, vector<8x128xf32> -> vector<8x128xf32>
    %cst_6 = arith.constant dense<0xFF800000> : vector<8xf32>
    %14 = vector.multi_reduction <maximumf>, %13, %cst_6 [1] : vector<8x128xf32> to vector<8xf32>
    %15 = vector.shape_cast %14 : vector<8xf32> to vector<8x1xf32>
    %16 = tpu.iota {dimensions = array<i32: 1>} : vector<8x128xi32>
    %17 = vector.broadcast %15 : vector<8x1xf32> to vector<8x128xf32>
    %18 = arith.cmpf oge, %13, %17 : vector<8x128xf32>
    %c128_i32 = arith.constant 128 : i32
    %19 = vector.broadcast %c128_i32 : i32 to vector<8x128xi32>
    %20 = arith.select %18, %16, %19 : vector<8x128xi1>, vector<8x128xi32>
    %cst_7 = arith.constant dense<2147483647> : vector<8xi32>
    %21 = vector.multi_reduction <minsi>, %20, %cst_7 [1] : vector<8x128xi32> to vector<8xi32>
    %22 = vector.shape_cast %21 : vector<8xi32> to vector<8x1xi32>
    %23 = vector.broadcast %22 : vector<8x1xi32> to vector<8x128xi32>
    %24 = arith.cmpi eq, %16, %23 : vector<8x128xi32>
    %25 = arith.extui %24 : vector<8x128xi1> to vector<8x128xi32>
    %26 = arith.sitofp %25 : vector<8x128xi32> to vector<8x128xf32>
    %c0_8 = arith.constant 0 : index
    %c0_9 = arith.constant 0 : index
    %27 = vector.load %arg2[%c0_8, %c0_9] : memref<128x32xf32, #tpu.memory_space<vmem>>, vector<128x32xf32>
    %cst_10 = arith.constant dense<0.000000e+00> : vector<8x32xf32>
    %28 = tpu.matmul %26, %27, %cst_10 {dimension_numbers = #tpu.dot_dimension_numbers<[1], [0], [0], [1], [0, 0, 1, 1], [], []>} : vector<8x128xf32>, vector<128x32xf32>, vector<8x32xf32> -> vector<8x32xf32>
    %c0_11 = arith.constant 0 : index
    %c0_12 = arith.constant 0 : index
    %29 = vector.load %arg4[%c0_11, %c0_12] : memref<8x32xf32, #tpu.memory_space<vmem>>, vector<8x32xf32>
    tpu.vector_store %arg4[%c0_11, %c0_12], %28 {strides = array<i32>} : memref<8x32xf32, #tpu.memory_space<vmem>>, vector<8x32xf32>,
    %c0_13 = arith.constant 0 : index
    %c0_14 = arith.constant 0 : index
    %30 = vector.load %arg5[%c0_13, %c0_14] : memref<8x1xi32, #tpu.memory_space<vmem>>, vector<8x1xi32>
    tpu.vector_store %arg5[%c0_13, %c0_14], %22 {strides = array<i32>} : memref<8x1xi32, #tpu.memory_space<vmem>>, vector<8x1xi32>,
    %c0_15 = arith.constant 0 : index
    %c0_16 = arith.constant 0 : index
    %31 = vector.load %arg6[%c0_15, %c0_16] : memref<8x128xf32, #tpu.memory_space<vmem>>, vector<8x128xf32>
    tpu.vector_store %arg6[%c0_15, %c0_16], %26 {strides = array<i32>} : memref<8x128xf32, #tpu.memory_space<vmem>>, vector<8x128xf32>,
    %32 = arith.subf %28, %3 : vector<8x32xf32>
    %33 = arith.mulf %32, %32 : vector<8x32xf32>
    %c0_17 = arith.constant 0 : index
    %c0_18 = arith.constant 0 : index
    %34 = vector.load %arg9[%c0_17, %c0_18] : memref<1x32xf32, #tpu.memory_space<vmem>>, vector<1x32xf32>
    %cst_19 = arith.constant dense<0.000000e+00> : vector<32xf32>
    %35 = vector.multi_reduction <add>, %33, %cst_19 [0] : vector<8x32xf32> to vector<32xf32>
    %36 = vector.shape_cast %35 : vector<32xf32> to vector<1x32xf32>
    %37 = arith.addf %34, %36 : vector<1x32xf32>
    %c0_20 = arith.constant 0 : index
    %c0_21 = arith.constant 0 : index
    %38 = vector.load %arg9[%c0_20, %c0_21] : memref<1x32xf32, #tpu.memory_space<vmem>>, vector<1x32xf32>
    tpu.vector_store %arg9[%c0_20, %c0_21], %37 {strides = array<i32>} : memref<1x32xf32, #tpu.memory_space<vmem>>, vector<1x32xf32>,
    %c0_22 = arith.constant 0 : index
    %c0_23 = arith.constant 0 : index
    %39 = vector.load %arg8[%c0_22, %c0_23] : memref<8x128xf32, #tpu.memory_space<vmem>>, vector<8x128xf32>
    %40 = vector.shape_cast %26 : vector<8x128xf32> to vector<1x8x128xf32>
    %cst_24 = arith.constant dense<0.000000e+00> : vector<8x128xf32>
    %41 = vector.multi_reduction <add>, %40, %cst_24 [0] : vector<1x8x128xf32> to vector<8x128xf32>
    %42 = arith.addf %39, %41 : vector<8x128xf32>
    %c0_25 = arith.constant 0 : index
    %c0_26 = arith.constant 0 : index
    %43 = vector.load %arg8[%c0_25, %c0_26] : memref<8x128xf32, #tpu.memory_space<vmem>>, vector<8x128xf32>
    tpu.vector_store %arg8[%c0_25, %c0_26], %42 {strides = array<i32>} : memref<8x128xf32, #tpu.memory_space<vmem>>, vector<8x128xf32>,
    %c1_i32 = arith.constant 1 : i32
    %44 = arith.cmpi eq, %arg0, %c1_i32 : i32
    %45 = arith.extui %44 : i1 to i32
    %c0_i32_27 = arith.constant 0 : i32
    %46 = arith.cmpi ne, %45, %c0_i32_27 : i32
    scf.if %46 {
      %c0_28 = arith.constant 0 : index
      %c0_29 = arith.constant 0 : index
      %47 = vector.load %arg9[%c0_28, %c0_29] : memref<1x32xf32, #tpu.memory_space<vmem>>, vector<1x32xf32>
      %cst_30 = arith.constant dense<0.000000e+00> : vector<1xf32>
      %48 = vector.multi_reduction <add>, %47, %cst_30 [1] : vector<1x32xf32> to vector<1xf32>
      %49 = vector.shape_cast %48 : vector<1xf32> to vector<1x1xf32>
      %cst_31 = arith.constant 0.001953125 : f32
      %50 = vector.broadcast %cst_31 : f32 to vector<1x1xf32>
      %51 = arith.mulf %49, %50 : vector<1x1xf32>
      %52 = vector.extract %51[0, 0] : f32 from vector<1x1xf32>
      %c0_32 = arith.constant 0 : index
      %53 = memref.load %arg7[%c0_32] : memref<3xf32, #tpu.memory_space<smem>>
      memref.store %52, %arg7[%c0_32] : memref<3xf32, #tpu.memory_space<smem>>
      %54 = vector.extract %51[0, 0] : f32 from vector<1x1xf32>
      %cst_33 = arith.constant 2.500000e-01 : f32
      %55 = arith.mulf %cst_33, %54 : f32
      %c1 = arith.constant 1 : index
      %56 = memref.load %arg7[%c1] : memref<3xf32, #tpu.memory_space<smem>>
      memref.store %55, %arg7[%c1] : memref<3xf32, #tpu.memory_space<smem>>
      %c0_34 = arith.constant 0 : index
      %c0_35 = arith.constant 0 : index
      %57 = vector.load %arg8[%c0_34, %c0_35] : memref<8x128xf32, #tpu.memory_space<vmem>>, vector<8x128xf32>
      %cst_36 = arith.constant 5.000000e-01 : f32
      %58 = vector.broadcast %cst_36 : f32 to vector<8x128xf32>
      %59 = arith.mulf %57, %58 : vector<8x128xf32>
      %cst_37 = arith.constant 1.000000e-10 : f32
      %60 = vector.broadcast %cst_37 : f32 to vector<8x128xf32>
      %61 = arith.addf %59, %60 : vector<8x128xf32>
      %62 = math.log %61 : vector<8x128xf32>
      %63 = arith.mulf %59, %62 : vector<8x128xf32>
      %cst_38 = arith.constant dense<0.000000e+00> : vector<8xf32>
      %64 = vector.multi_reduction <add>, %63, %cst_38 [1] : vector<8x128xf32> to vector<8xf32>
      %65 = vector.shape_cast %64 : vector<8xf32> to vector<8x1xf32>
      %cst_39 = arith.constant dense<0.000000e+00> : vector<1xf32>
      %66 = vector.multi_reduction <add>, %65, %cst_39 [0] : vector<8x1xf32> to vector<1xf32>
      %67 = vector.shape_cast %66 : vector<1xf32> to vector<1x1xf32>
      %cst_40 = arith.constant 0.000000e+00 : f32
      %68 = vector.broadcast %cst_40 : f32 to vector<1x1xf32>
      %69 = arith.subf %68, %67 : vector<1x1xf32>
      %70 = math.exp %69 : vector<1x1xf32>
      %71 = vector.extract %70[0, 0] : f32 from vector<1x1xf32>
      %c2 = arith.constant 2 : index
      %72 = memref.load %arg7[%c2] : memref<3xf32, #tpu.memory_space<smem>>
      memref.store %71, %arg7[%c2] : memref<3xf32, #tpu.memory_space<smem>>
    } else {
    }
    return
  }
  func.func @transform_0(%arg0: i32) -> (i32, i32) {
    %c0_i32 = arith.constant 0 : i32
    %c0_i32_0 = arith.constant 0 : i32
    return %arg0, %c0_i32 : i32, i32
  }
  func.func @transform_1(%arg0: i32) -> (i32, i32) {
    %c0_i32 = arith.constant 0 : i32
    %c0_i32_0 = arith.constant 0 : i32
    %c0_i32_1 = arith.constant 0 : i32
    return %c0_i32, %c0_i32_0 : i32, i32
  }
  func.func @transform_2(%arg0: i32) -> (i32, i32) {
    %c0_i32 = arith.constant 0 : i32
    %c0_i32_0 = arith.constant 0 : i32
    %c0_i32_1 = arith.constant 0 : i32
    return %c0_i32, %c0_i32_0 : i32, i32
  }
  func.func @transform_3(%arg0: i32) -> (i32, i32) {
    %c0_i32 = arith.constant 0 : i32
    %c0_i32_0 = arith.constant 0 : i32
    return %arg0, %c0_i32 : i32, i32
  }
  func.func @transform_4(%arg0: i32) -> (i32, i32) {
    %c0_i32 = arith.constant 0 : i32
    %c0_i32_0 = arith.constant 0 : i32
    return %arg0, %c0_i32 : i32, i32
  }
  func.func @transform_5(%arg0: i32) -> (i32, i32) {
    %c0_i32 = arith.constant 0 : i32
    %c0_i32_0 = arith.constant 0 : i32
    return %arg0, %c0_i32 : i32, i32
  }
  func.func @transform_6(%arg0: i32) -> i32 {
    %c0_i32 = arith.constant 0 : i32
    %c0_i32_0 = arith.constant 0 : i32
    return %c0_i32 : i32
  }
}

</mosaic_0001>

<llo_original>
// kernel: tpu_custom_call.1
$region0: #{tpu_custom_call.1}
  #allocation0 [shape = 'u32[]', space=smem, size = 0x4, offset = 0x4, fixed_abs, tag = 'smem constant byte address 0x4 - core index']
  #allocation1 [shape = 'u32[144,128]{1,0:T(1,128)}', space=vmem, size = 0x12000, scoped, tag = 'internal scratch']
  #allocation2 [shape = 'f32[8,128]{1,0:T(8,128)}', space=vmem, size = 0x1000, scoped, tag = 'scratch operand']
  #allocation3 [shape = 'f32[1,32]{1,0:T(1,128)}', space=vmem, size = 0x200, scoped, tag = 'scratch operand']
  %s0 = inlined_call_operand.vmem [shape: f32[16,32], index: 0, kind: input, shape index: {}]
  %s1 = inlined_call_operand.vmem [shape: f32[128,32], index: 1, kind: input, shape index: {}]
  %s2 = inlined_call_operand.vmem [shape: f32[128,32], index: 2, kind: input, shape index: {}]
  %s3 = inlined_call_operand.hbm [shape: f32[16,32], index: 3, kind: output, shape index: {0}]
  %s4 = inlined_call_operand.vmem [shape: s32[16,1], index: 4, kind: output, shape index: {1}]
  %s5 = inlined_call_operand.hbm [shape: f32[16,128], index: 5, kind: output, shape index: {2}]
  %s6 = inlined_call_operand.hbm [shape: f32[3], index: 6, kind: output, shape index: {3}]
  %7 = xla_tuple %s3, %s4, %s5, %s6
  %s8 = sld [smem:[#allocation0]]
  $region77: #{tpu_custom_call.1} parent=0
    _
  %s10 = ssub.s32 1, %s8
  %s11 = scalar_select 0, %s10, %s8
  $region1: #{tpu_custom_call.1} parent=0
    #allocation4 [shape = 'u8[8192]{0}', space=vmem, size = 0x2000, scoped, tag = 'output window, operand 0']
    #allocation5 [shape = 's32[2]{0}', space=sflag, size = 0x8, scoped, tag = 'scoped memory for tpu_custom_call.1']
    #allocation6 [shape = 's32[2]{0}', space=sflag, size = 0x8, scoped, tag = 'scoped memory for tpu_custom_call.1']
    #allocation7 [shape = 'u8[8192]{0}', space=vmem, size = 0x2000, scoped, tag = 'output window, operand 2']
    #allocation8 [shape = 's32[2]{0}', space=sflag, size = 0x8, scoped, tag = 'scoped memory for tpu_custom_call.1']
    #allocation9 [shape = 'u8[512]{0}', space=smem, size = 0x200, scoped, tag = 'output window, operand 3, single buffered']
    %12 = vsyncpa [#allocation5], 0
    %s13 = scalar_lea.sflag [#allocation5], 1
    %14 = vsyncpa %s13, 0
    %15 = vsyncpa [#allocation8], 0
    %s16 = scalar_lea.sflag [#allocation8], 1
    %17 = vsyncpa %s16, 0
    %18 = vsyncpa [#allocation6], 0
    loop: start=0, step=1, limit=4
    $region2: #{tpu_custom_call.1} parent=1 // loop_pre_header
      _
    $region3: #{tpu_custom_call.1} parent=1 // loop_header
      %s20 = sphi 0, %s24
      %p21 = scmp.ge.s32.totalorder %s20, 4
      %s30 = sphi 0, %s32
      %s33 = sphi 0, %s30
      %s34 = sphi 0, %s33
      %s50 = sphi 0, %s34
      %s54 = sphi 0, %s54
      %s56 = sphi 0, %s54
      %s57 = sphi 0, %s56
      %s71 = sphi 0, %s57
      %s75 = sphi 0, %s75
      %s77 = sphi 0, %s75
      %s78 = sphi 0, %s77
      %s92 = sphi 0, %s78
      %s98 = sphi 0, %s100
      %s101 = sphi 0, %s98
      %s102 = sphi 0, %s101
      %s118 = sphi 0, %s102
      %s124 = sphi 0, %s126
      %s127 = sphi 0, %s124
      %s128 = sphi 0, %s127
      %s144 = sphi 0, %s128
      %s150 = sphi 0, %s152
      %s153 = sphi 0, %s150
      %s154 = sphi 0, %s153
      %s170 = sphi 0, %s154
      %s174 = sphi 0, %s174
      %s176 = sphi 0, %s174
      %s177 = sphi 0, %s176
      %s191 = sphi 0, %s177
    $region4: #{tpu_custom_call.1} parent=1 // loop_header_branch
      %23 = sbr.rel (%p21) target = $region8
    $region5: #{tpu_custom_call.1} parent=1 // loop_body
      %s25 = ssub.s32 %s20, 1
      %s26 = ssub.s32 %s20, 2
      %s27 = sadd.s32 %s20, 1
      %s28 = ssub.s32 %s20, %s27
      %p29 = scmp.eq.s32.totalorder %s28, 0
      %s31 = sadd.s32 %s30, 1
      %s32 = scalar_select %p29, %s30, %s31
      %p35 = pneg %p29
      %p36 = scmp.eq.s32.totalorder %s20, 1
      %p37 = por %p35, %p36
      %p38 = scmp.ne.s32.totalorder %s30, %s33
      %p39 = scmp.eq.s32.totalorder %s20, 0
      %p40 = por %p38, %p39
      %p41 = scmp.ne.s32.totalorder %s30, %s33
      %p42 = scmp.eq.s32.totalorder %s25, 1
      %p43 = por %p41, %p42
      %p44 = scmp.ne.s32.totalorder %s33, %s34
      %p45 = scmp.eq.s32.totalorder %s25, 0
      %p46 = por %p44, %p45
      %p47 = scmp.ne.s32.totalorder %s33, %s34
      %p48 = scmp.eq.s32.totalorder %s26, 1
      %p49 = por %p47, %p48
      %p51 = scmp.ne.s32.totalorder %s34, %s50
      %p52 = scmp.eq.s32.totalorder %s26, 0
      %p53 = por %p51, %p52
      %s55 = sadd.s32 %s54, 1
      %p58 = scmp.eq.s32.totalorder %s20, 1
      %p59 = scmp.ne.s32.totalorder %s54, %s56
      %p60 = scmp.eq.s32.totalorder %s20, 0
      %p61 = por %p59, %p60
      %p62 = scmp.ne.s32.totalorder %s54, %s56
      %p63 = scmp.eq.s32.totalorder %s25, 1
      %p64 = por %p62, %p63
      %p65 = scmp.ne.s32.totalorder %s56, %s57
      %p66 = scmp.eq.s32.totalorder %s25, 0
      %p67 = por %p65, %p66
      %p68 = scmp.ne.s32.totalorder %s56, %s57
      %p69 = scmp.eq.s32.totalorder %s26, 1
      %p70 = por %p68, %p69
      %p72 = scmp.ne.s32.totalorder %s57, %s71
      %p73 = scmp.eq.s32.totalorder %s26, 0
      %p74 = por %p72, %p73
      %s76 = sadd.s32 %s75, 1
      %p79 = scmp.eq.s32.totalorder %s20, 1
      %p80 = scmp.ne.s32.totalorder %s75, %s77
      %p81 = scmp.eq.s32.totalorder %s20, 0
      %p82 = por %p80, %p81
      %p83 = scmp.ne.s32.totalorder %s75, %s77
      %p84 = scmp.eq.s32.totalorder %s25, 1
      %p85 = por %p83, %p84
      %p86 = scmp.ne.s32.totalorder %s77, %s78
      %p87 = scmp.eq.s32.totalorder %s25, 0
      %p88 = por %p86, %p87
      %p89 = scmp.ne.s32.totalorder %s77, %s78
      %p90 = scmp.eq.s32.totalorder %s26, 1
      %p91 = por %p89, %p90
      %p93 = scmp.ne.s32.totalorder %s78, %s92
      %p94 = scmp.eq.s32.totalorder %s26, 0
      %p95 = por %p93, %p94
      %s96 = ssub.s32 %s20, %s27
      %p97 = scmp.eq.s32.totalorder %s96, 0
      %s99 = sadd.s32 %s98, 1
      %s100 = scalar_select %p97, %s98, %s99
      %p103 = pneg %p97
      %p104 = scmp.eq.s32.totalorder %s20, 1
      %p105 = por %p103, %p104
      %p106 = scmp.ne.s32.totalorder %s98, %s101
      %p107 = scmp.eq.s32.totalorder %s20, 0
      %p108 = por %p106, %p107
      %p109 = scmp.ne.s32.totalorder %s98, %s101
      %p110 = scmp.eq.s32.totalorder %s25, 1
      %p111 = por %p109, %p110
      %p112 = scmp.ne.s32.totalorder %s101, %s102
      %p113 = scmp.eq.s32.totalorder %s25, 0
      %p114 = por %p112, %p113
      %p115 = scmp.ne.s32.totalorder %s101, %s102
      %p116 = scmp.eq.s32.totalorder %s26, 1
      %p117 = por %p115, %p116
      %p119 = scmp.ne.s32.totalorder %s102, %s118
      %p120 = scmp.eq.s32.totalorder %s26, 0
      %p121 = por %p119, %p120
      %s122 = ssub.s32 %s20, %s27
      %p123 = scmp.eq.s32.totalorder %s122, 0
      %s125 = sadd.s32 %s124, 1
      %s126 = scalar_select %p123, %s124, %s125
      %p129 = pneg %p123
      %p130 = scmp.eq.s32.totalorder %s20, 1
      %p131 = por %p129, %p130
      %p132 = scmp.ne.s32.totalorder %s124, %s127
      %p133 = scmp.eq.s32.totalorder %s20, 0
      %p134 = por %p132, %p133
      %p135 = scmp.ne.s32.totalorder %s124, %s127
      %p136 = scmp.eq.s32.totalorder %s25, 1
      %p137 = por %p135, %p136
      %p138 = scmp.ne.s32.totalorder %s127, %s128
      %p139 = scmp.eq.s32.totalorder %s25, 0
      %p140 = por %p138, %p139
      %p141 = scmp.ne.s32.totalorder %s127, %s128
      %p142 = scmp.eq.s32.totalorder %s26, 1
      %p143 = por %p141, %p142
      %p145 = scmp.ne.s32.totalorder %s128, %s144
      %p146 = scmp.eq.s32.totalorder %s26, 0
      %p147 = por %p145, %p146
      %s148 = ssub.s32 %s20, %s27
      %p149 = scmp.eq.s32.totalorder %s148, 0
      %s151 = sadd.s32 %s150, 1
      %s152 = scalar_select %p149, %s150, %s151
      %p155 = pneg %p149
      %p156 = scmp.eq.s32.totalorder %s20, 1
      %p157 = por %p155, %p156
      %p158 = scmp.ne.s32.totalorder %s150, %s153
      %p159 = scmp.eq.s32.totalorder %s20, 0
      %p160 = por %p158, %p159
      %p161 = scmp.ne.s32.totalorder %s150, %s153
      %p162 = scmp.eq.s32.totalorder %s25, 1
      %p163 = por %p161, %p162
      %p164 = scmp.ne.s32.totalorder %s153, %s154
      %p165 = scmp.eq.s32.totalorder %s25, 0
      %p166 = por %p164, %p165
      %p167 = scmp.ne.s32.totalorder %s153, %s154
      %p168 = scmp.eq.s32.totalorder %s26, 1
      %p169 = por %p167, %p168
      %p171 = scmp.ne.s32.totalorder %s154, %s170
      %p172 = scmp.eq.s32.totalorder %s26, 0
      %p173 = por %p171, %p172
      %s175 = sadd.s32 %s174, 1
      %p178 = scmp.eq.s32.totalorder %s20, 1
      %p179 = scmp.ne.s32.totalorder %s174, %s176
      %p180 = scmp.eq.s32.totalorder %s20, 0
      %p181 = por %p179, %p180
      %p182 = scmp.ne.s32.totalorder %s174, %s176
      %p183 = scmp.eq.s32.totalorder %s25, 1
      %p184 = por %p182, %p183
      %p185 = scmp.ne.s32.totalorder %s176, %s177
      %p186 = scmp.eq.s32.totalorder %s25, 0
      %p187 = por %p185, %p186
      %p188 = scmp.ne.s32.totalorder %s176, %s177
      %p189 = scmp.eq.s32.totalorder %s26, 1
      %p190 = por %p188, %p189
      %p192 = scmp.ne.s32.totalorder %s177, %s191
      %p193 = scmp.eq.s32.totalorder %s26, 0
      %p194 = por %p192, %p193
      %p195 = scmp.le.s32.totalorder 1, %s20
      %p196 = scmp.lt.s32.totalorder %s20, 3
      %p197 = pnand %p195, %p196
      %p198 = pneg %p197
      // Predicated region
      $region9: #{tpu_custom_call.1} parent=5 // pred_check
        _
      $region10: #{tpu_custom_call.1} parent=5 // pred_check_branch
        %200 = sbr.rel (%p197) target = $region12
      $region11: #{tpu_custom_call.1} parent=5 // pred_region
        %s201 = ssub.s32 %s20, 1
        // Predicated region
        $region13: #{tpu_custom_call.1} parent=11 // pred_check
          %p202 = pneg %p67
        $region14: #{tpu_custom_call.1} parent=11 // pred_check_branch
          %204 = sbr.rel (%p202) target = $region16
        $region15: #{tpu_custom_call.1} parent=11 // pred_region
          _
        $region16: #{tpu_custom_call.1} parent=11 // pred_fallthru
          _
        // Predicated region
        $region17: #{tpu_custom_call.1} parent=11 // pred_check
          %p205 = pneg %p88
        $region18: #{tpu_custom_call.1} parent=11 // pred_check_branch
          %207 = sbr.rel (%p205) target = $region20
        $region19: #{tpu_custom_call.1} parent=11 // pred_region
          _
        $region20: #{tpu_custom_call.1} parent=11 // pred_fallthru
          _
      $region12: #{tpu_custom_call.1} parent=5 // pred_fallthru
        _
      %p208 = scmp.lt.s32.totalorder %s20, 2
      // Predicated region
      $region21: #{tpu_custom_call.1} parent=5 // pred_check
        %p209 = pneg %p208
      $region22: #{tpu_custom_call.1} parent=5 // pred_check_branch
        %211 = sbr.rel (%p209) target = $region24
      $region23: #{tpu_custom_call.1} parent=5 // pred_region
        // Predicated region
        $region25: #{tpu_custom_call.1} parent=23 // pred_check
          %p212 = pneg %p40
        $region26: #{tpu_custom_call.1} parent=23 // pred_check_branch
          %214 = sbr.rel (%p212) target = $region28
        $region27: #{tpu_custom_call.1} parent=23 // pred_region
          %p215 = scmp.lt.s32.totalorder %s20, 1
          %s216 = scalar_select %p215, %s20, 1
          %s217 = smul.addr %s216, 8
          %s218 = scalar_lea.vmem %s0, %s217
        $region28: #{tpu_custom_call.1} parent=23 // pred_fallthru
          _
      $region24: #{tpu_custom_call.1} parent=5 // pred_fallthru
        _
      %p219 = scmp.le.s32.totalorder 1, %s20
      %p220 = scmp.lt.s32.totalorder %s20, 3
      %p221 = pnand %p219, %p220
      %p222 = pneg %p221
      // Predicated region
      $region29: #{tpu_custom_call.1} parent=5 // pred_check
        _
      $region30: #{tpu_custom_call.1} parent=5 // pred_check_branch
        %224 = sbr.rel (%p221) target = $region32
      $region31: #{tpu_custom_call.1} parent=5 // pred_region
        %s225 = ssub.s32 %s20, 1
        %p226 = scmp.lt.s32.totalorder %s25, 1
        %s227 = scalar_select %p226, %s25, 1
        %s228 = smul.addr %s227, 8
        %s229 = scalar_lea.vmem %s0, %s228
        %p230 = pneg %p46
        %p231 = pneg %p43
        %p232 = pneg %p67
        %p233 = pneg %p64
        %p234 = pneg %p88
        %p235 = pneg %p85
        %p236 = pneg %p114
        %p237 = pneg %p111
        %s238 = sand.u32 %s101, 1
        %s239 = scalar_lea.sflag [#allocation5], %s238
        %s240 = sand.u32 %s101, 1
        %s241 = smul.addr %s240, 8
        %s242 = scalar_lea.vmem [#allocation4], %s241
        %p243 = pneg %p140
        %p244 = pneg %p137
        %p245 = scmp.lt.s32.totalorder %s25, 1
        %s246 = scalar_select %p245, %s25, 1
        %s247 = smul.addr %s246, 8
        %s248 = scalar_lea.vmem %s4, %s247
        %p249 = pneg %p166
        %p250 = pneg %p163
        %s251 = sand.u32 %s153, 1
        %s252 = scalar_lea.sflag [#allocation8], %s251
        %s253 = sand.u32 %s153, 1
        %s254 = smul.addr %s253, 8
        %s255 = scalar_lea.vmem [#allocation7], %s254
        %p256 = pneg %p187
        %p257 = pneg %p184
        %p258 = scmp.lt.s32.totalorder %s25, 1
        %s259 = scalar_select %p258, %s25, 1
        %s260 = smul.addr %s259, 8
        %s261 = scalar_lea.vmem %s0, %s260
        %p262 = scmp.lt.s32.totalorder %s25, 1
        %s263 = scalar_select %p262, %s25, 1
        %s264 = smul.addr %s263, 8
        %s265 = scalar_lea.vmem %s4, %s264
        %p266 = scmp.eq.s32.totalorder %s25, 0
        // Predicated region
        $region33: #{tpu_custom_call.1} parent=31 // pred_check
          %p267 = pneg %p266
        $region34: #{tpu_custom_call.1} parent=31 // pred_check_branch
          %269 = sbr.rel (%p267) target = $region36
        $region35: #{tpu_custom_call.1} parent=31 // pred_region
          %270 = vst [vmem:[#allocation2] sm:$0xff] 0.0
          %vm271 = vcmask 253952
          %272 = vst.msk [vmem:[#allocation3] sm:$0x1] %vm271, 0.0
        $region36: #{tpu_custom_call.1} parent=31 // pred_fallthru
          _
        %v273 = vld [vmem:[%s261] sm:$0xff]
        %v274 = vmul.f32 %v273, %v273
        %vm275 = vcmask 261120
        %v276 = vsel %vm275, %v274, 0.0
        %277 = vadd.xlane.f32.xlu0 %v276
        %v278 = vpop.xlane.xlu0 %277
        %v279 = vmax.f32 %v278, 1e-24
        %v280 = vrsqrt.pop %v279
        %v281 = vmul.f32 %v273, %v280
        %v282 = vld [vmem:[%s2] sm:$0xff]
        %v283 = vld [vmem:[%s2 + $0x8] sm:$0xff]
        %v284 = vld [vmem:[%s2 + $0x10] sm:$0xff]
        %v285 = vld [vmem:[%s2 + $0x18] sm:$0xff]
        %v286 = vld [vmem:[%s2 + $0x20] sm:$0xff]
        %v287 = vld [vmem:[%s2 + $0x28] sm:$0xff]
        %v288 = vld [vmem:[%s2 + $0x30] sm:$0xff]
        %v289 = vld [vmem:[%s2 + $0x38] sm:$0xff]
        %v290 = vld [vmem:[%s2 + $0x40] sm:$0xff]
        %v291 = vld [vmem:[%s2 + $0x48] sm:$0xff]
        %v292 = vld [vmem:[%s2 + $0x50] sm:$0xff]
        %v293 = vld [vmem:[%s2 + $0x58] sm:$0xff]
        %v294 = vld [vmem:[%s2 + $0x60] sm:$0xff]
        %v295 = vld [vmem:[%s2 + $0x68] sm:$0xff]
        %v296 = vld [vmem:[%s2 + $0x70] sm:$0xff]
        %v297 = vld [vmem:[%s2 + $0x78] sm:$0xff]
        %v299 = vsel %vm275, %v281, 0
        %v302 = vsel %vm275, %v282, 0
        %v305 = vsel %vm275, %v283, 0
        %v308 = vsel %vm275, %v284, 0
        %v311 = vsel %vm275, %v285, 0
        %v314 = vsel %vm275, %v286, 0
        %v317 = vsel %vm275, %v287, 0
        %v320 = vsel %vm275, %v288, 0
        %v323 = vsel %vm275, %v289, 0
        %v326 = vsel %vm275, %v290, 0
        %v329 = vsel %vm275, %v291, 0
        %v332 = vsel %vm275, %v292, 0
        %v335 = vsel %vm275, %v293, 0
        %v338 = vsel %vm275, %v294, 0
        %v341 = vsel %vm275, %v295, 0
        %v344 = vsel %vm275, %v296, 0
        %v347 = vsel %vm275, %v297, 0
        %349 = vmatprep.subr.mxu0 0.0
        %350 = vmatpush1.xpose.msra.mxu0 %v347
        %351 = vmatprep.subr.mxu0 0.0
        %352 = vmatpush1.xpose.msra.mxu0 %v344
        %353 = vmatprep.subr.mxu0 0.0
        %354 = vmatpush1.xpose.msra.mxu0 %v341
        %355 = vmatprep.subr.mxu0 0.0
        %356 = vmatpush1.xpose.msra.mxu0 %v338
        %357 = vmatprep.subr.mxu0 0.0
        %358 = vmatpush1.xpose.msra.mxu0 %v335
        %359 = vmatprep.subr.mxu0 0.0
        %360 = vmatpush1.xpose.msra.mxu0 %v332
        %361 = vmatprep.subr.mxu0 0.0
        %362 = vmatpush1.xpose.msra.mxu0 %v329
        %363 = vmatprep.subr.mxu0 0.0
        %364 = vmatpush1.xpose.msra.mxu0 %v326
        %365 = vmatprep.subr.mxu0 0.0
        %366 = vmatpush1.xpose.msra.mxu0 %v323
        %367 = vmatprep.subr.mxu0 0.0
        %368 = vmatpush1.xpose.msra.mxu0 %v320
        %369 = vmatprep.subr.mxu0 0.0
        %370 = vmatpush1.xpose.msra.mxu0 %v317
        %371 = vmatprep.subr.mxu0 0.0
        %372 = vmatpush1.xpose.msra.mxu0 %v314
        %373 = vmatprep.subr.mxu0 0.0
        %374 = vmatpush1.xpose.msra.mxu0 %v311
        %375 = vmatprep.subr.mxu0 0.0
        %376 = vmatpush1.xpose.msra.mxu0 %v308
        %377 = vmatprep.subr.mxu0 0.0
        %378 = vmatpush1.xpose.msra.mxu0 %v305
        %379 = vmatprep.subr.mxu0 0.0
        %380 = vmatpush1.xpose.msra.mxu0 %v302
        %381 = vmatprep.subr.mxu0 0.0
        %382 = vmatpush2.xpose.msra.mxu0 0.0
        %383 = vmatprep.subr.mxu0 0.0
        %384 = vmatpush2.xpose.msra.mxu0 0.0
        %385 = vmatprep.subr.mxu0 0.0
        %386 = vmatpush2.xpose.msra.mxu0 0.0
        %387 = vmatprep.subr.mxu0 0.0
        %388 = vmatpush2.xpose.msra.mxu0 0.0
        %389 = vmatprep.subr.mxu0 0.0
        %390 = vmatpush2.xpose.msra.mxu0 0.0
        %391 = vmatprep.subr.mxu0 0.0
        %392 = vmatpush2.xpose.msra.mxu0 0.0
        %393 = vmatprep.subr.mxu0 0.0
        %394 = vmatpush2.xpose.msra.mxu0 0.0
        %395 = vmatprep.subr.mxu0 0.0
        %396 = vmatpush2.xpose.msra.mxu0 0.0
        %397 = vmatprep.subr.mxu0 0.0
        %398 = vmatpush2.xpose.msra.mxu0 0.0
        %399 = vmatprep.subr.mxu0 0.0
        %400 = vmatpush2.xpose.msra.mxu0 0.0
        %401 = vmatprep.subr.mxu0 0.0
        %402 = vmatpush2.xpose.msra.mxu0 0.0
        %403 = vmatprep.subr.mxu0 0.0
        %404 = vmatpush2.xpose.msra.mxu0 0.0
        %405 = vmatprep.subr.mxu0 0.0
        %406 = vmatpush2.xpose.msra.mxu0 0.0
        %407 = vmatprep.subr.mxu0 0.0
        %408 = vmatpush2.xpose.msra.mxu0 0.0
        %409 = vmatprep.subr.mxu0 0.0
        %410 = vmatpush2.xpose.msra.mxu0 0.0
        %411 = vmatprep.subr.mxu0 0.0
        %412 = vmatpush2.xpose.msra.mxu0 0.0
        %413 = vmatprep.mubr.f32.mxu0 0.0
        %414 = vmatmul.mubr.f32.gmra.mxu0 %v299
        %v415 = vpop.f32.mrf.mxu0
        %v416 = vadd.f32 0.0, %v415
        %v417 = vpop.f32.mrf.mxu0
        %418 = vdwg.mxu0
        %419 = vmax.xlane.f32.xlu0 %v416
        %v420 = vpop.xlane.xlu0 %419
        %v421 = vlaneseq
        %v422 = vand.u32 %v421, 127
        %vm423 = vcmp.ge.f32.partialorder %v416, %v420
        %v424 = vsel %vm423, %v422, 128
        %v425 = vand.u32 %v424, 65535
        %v426 = vshra.s32 %v424, 16
        %v427 = vcvt.s32.f32 %v425
        %v428 = vcvt.s32.f32 %v426
        %429 = vmin.xlane.f32.xlu0 %v428
        %v430 = vpop.xlane.xlu0 %429
        %vm431 = vcmp.eq.f32.partialorder %v428, %v430
        %v432 = vsel %vm431, %v427, inf
        %433 = vmin.xlane.f32.xlu0 %v432
        %v434 = vpop.xlane.xlu0 %433
        %v435 = vcvt.f32.s32 %v434
        %v436 = vcvt.f32.s32 %v430
        %v437 = vshll.u32 %v436, 16
        %v438 = vadd.s32 %v437, %v435
        %vm439 = vcmp.eq.s32.totalorder %v422, %v438
        %v440 = vsel %vm439, 1, 0
        %v441 = vcvt.s32.f32 %v440
        %v442 = vld [vmem:[%s1] sm:$0xff]
        %v443 = vld [vmem:[%s1 + $0x8] sm:$0xff]
        %v444 = vld [vmem:[%s1 + $0x10] sm:$0xff]
        %v445 = vld [vmem:[%s1 + $0x18] sm:$0xff]
        %v446 = vld [vmem:[%s1 + $0x20] sm:$0xff]
        %v447 = vld [vmem:[%s1 + $0x28] sm:$0xff]
        %v448 = vld [vmem:[%s1 + $0x30] sm:$0xff]
        %v449 = vld [vmem:[%s1 + $0x38] sm:$0xff]
        %v450 = vld [vmem:[%s1 + $0x40] sm:$0xff]
        %v451 = vld [vmem:[%s1 + $0x48] sm:$0xff]
        %v452 = vld [vmem:[%s1 + $0x50] sm:$0xff]
        %v453 = vld [vmem:[%s1 + $0x58] sm:$0xff]
        %v454 = vld [vmem:[%s1 + $0x60] sm:$0xff]
        %v455 = vld [vmem:[%s1 + $0x68] sm:$0xff]
        %v456 = vld [vmem:[%s1 + $0x70] sm:$0xff]
        %v457 = vld [vmem:[%s1 + $0x78] sm:$0xff]
        %458 = vmatprep.subr.mxu0 0.0
        %459 = vmatpush1.msra.mxu0 %v457
        %460 = vmatprep.subr.mxu0 0.0
        %461 = vmatpush1.msra.mxu0 %v456
        %462 = vmatprep.subr.mxu0 0.0
        %463 = vmatpush1.msra.mxu0 %v455
        %464 = vmatprep.subr.mxu0 0.0
        %465 = vmatpush1.msra.mxu0 %v454
        %466 = vmatprep.subr.mxu0 0.0
        %467 = vmatpush1.msra.mxu0 %v453
        %468 = vmatprep.subr.mxu0 0.0
        %469 = vmatpush1.msra.mxu0 %v452
        %470 = vmatprep.subr.mxu0 0.0
        %471 = vmatpush1.msra.mxu0 %v451
        %472 = vmatprep.subr.mxu0 0.0
        %473 = vmatpush1.msra.mxu0 %v450
        %474 = vmatprep.subr.mxu0 0.0
        %475 = vmatpush1.msra.mxu0 %v449
        %476 = vmatprep.subr.mxu0 0.0
        %477 = vmatpush1.msra.mxu0 %v448
        %478 = vmatprep.subr.mxu0 0.0
        %479 = vmatpush1.msra.mxu0 %v447
        %480 = vmatprep.subr.mxu0 0.0
        %481 = vmatpush1.msra.mxu0 %v446
        %482 = vmatprep.subr.mxu0 0.0
        %483 = vmatpush1.msra.mxu0 %v445
        %484 = vmatprep.subr.mxu0 0.0
        %485 = vmatpush1.msra.mxu0 %v444
        %486 = vmatprep.subr.mxu0 0.0
        %487 = vmatpush1.msra.mxu0 %v443
        %488 = vmatprep.subr.mxu0 0.0
        %489 = vmatpush1.msra.mxu0 %v442
        %490 = vmatprep.subr.mxu0 0.0
        %491 = vmatpush2.msra.mxu0 0.0
        %492 = vmatprep.subr.mxu0 0.0
        %493 = vmatpush2.msra.mxu0 0.0
        %494 = vmatprep.subr.mxu0 0.0
        %495 = vmatpush2.msra.mxu0 0.0
        %496 = vmatprep.subr.mxu0 0.0
        %497 = vmatpush2.msra.mxu0 0.0
        %498 = vmatprep.subr.mxu0 0.0
        %499 = vmatpush2.msra.mxu0 0.0
        %500 = vmatprep.subr.mxu0 0.0
        %501 = vmatpush2.msra.mxu0 0.0
        %502 = vmatprep.subr.mxu0 0.0
        %503 = vmatpush2.msra.mxu0 0.0
        %504 = vmatprep.subr.mxu0 0.0
        %505 = vmatpush2.msra.mxu0 0.0
        %506 = vmatprep.subr.mxu0 0.0
        %507 = vmatpush2.msra.mxu0 0.0
        %508 = vmatprep.subr.mxu0 0.0
        %509 = vmatpush2.msra.mxu0 0.0
        %510 = vmatprep.subr.mxu0 0.0
        %511 = vmatpush2.msra.mxu0 0.0
        %512 = vmatprep.subr.mxu0 0.0
        %513 = vmatpush2.msra.mxu0 0.0
        %514 = vmatprep.subr.mxu0 0.0
        %515 = vmatpush2.msra.mxu0 0.0
        %516 = vmatprep.subr.mxu0 0.0
        %517 = vmatpush2.msra.mxu0 0.0
        %518 = vmatprep.subr.mxu0 0.0
        %519 = vmatpush2.msra.mxu0 0.0
        %520 = vmatprep.subr.mxu0 0.0
        %521 = vmatpush2.msra.mxu0 0.0
        %522 = vmatprep.mubr.f32.mxu0 0.0
        %523 = vmatmul.mubr.f32.gmra.mxu0 %v441
        %v524 = vpop.f32.mrf.mxu0
        %v525 = vadd.f32 0.0, %v524
        %v526 = vpop.f32.mrf.mxu0
        %527 = vdwg.mxu0
        %528 = vst.msk [vmem:[%s242] sm:$0xff] %vm275, %v525
        %vm529 = vcmask 7168
        %530 = vst.msk [vmem:[%s265] sm:$0xff] %vm529, %v438
        %531 = vst [vmem:[%s255] sm:$0xff] %v441
        %v532 = vsub.f32 %v525, %v273
        %v533 = vmul.f32 %v532, %v532
        %v534 = vld [vmem:[#allocation3] sm:$0x1]
        %v535 = vsel %vm275, %v533, 0.0
        %v536 = vrot.slane %v535, 4
        %v537 = vadd.f32 %v535, %v536
        %v538 = vrot.slane %v537, 2
        %v539 = vadd.f32 %v537, %v538
        %v540 = vrot.slane %v539, 1
        %v541 = vadd.f32 %v539, %v540
        %v542 = vadd.f32 %v534, %v541
        %vm543 = vcmask 253952
        %544 = vst.msk [vmem:[#allocation3] sm:$0x1] %vm543, %v542
        %v545 = vld [vmem:[#allocation2] sm:$0xff]
        %v546 = vadd.f32 %v441, 0.0
        %v547 = vadd.f32 %v545, %v546
        %548 = vst [vmem:[#allocation2] sm:$0xff] %v547
        %p549 = scmp.eq.s32.totalorder %s25, 1
        // Predicated region
        $region37: #{tpu_custom_call.1} parent=31 // pred_check
          %p550 = pneg %p549
        $region38: #{tpu_custom_call.1} parent=31 // pred_check_branch
          %552 = sbr.rel (%p550) target = $region40
        $region39: #{tpu_custom_call.1} parent=31 // pred_region
          %v553 = vld [vmem:[#allocation3] sm:$0x1]
          %v554 = vsel %vm543, %v553, 0.0
          %555 = vadd.xlane.f32.xlu0 %v554
          %v556 = vpop.xlane.xlu0 %555
          %v557 = vmul.f32 %v556, 0.001953125
          %s558 = vtos %v557
          %s559 = scalar_lea.smem [#allocation9], 0
          %560 = sst [smem:[%s559]] %s558
          %s561 = smul.f32 %s558, 0.25
          %s562 = scalar_lea.smem [#allocation9], 1
          %563 = sst [smem:[%s562]] %s561
          %v564 = vld [vmem:[#allocation2] sm:$0xff]
          %v565 = vmul.f32 %v564, 0.5
          %v566 = vadd.f32 %v565, 1e-10
          %v567 = vlog2.pop %v566
          %v568 = vmul.f32 %v567, 0.6931472
          %v569 = vmul.f32 %v565, %v568
          %570 = vadd.xlane.f32.xlu0 %v569
          %v571 = vpop.xlane.xlu0 %570
          %v572 = vrot.slane %v571, 4
          %v573 = vadd.f32 %v571, %v572
          %v574 = vrot.slane %v573, 2
          %v575 = vadd.f32 %v573, %v574
          %v576 = vrot.slane %v575, 1
          %v577 = vadd.f32 %v575, %v576
          %v578 = vsub.f32 0.0, %v577
          %v579 = vmul.f32 %v578, 1.442695
          %v580 = vpow.pop %v579
          %s581 = vtos %v580
          %s582 = scalar_lea.smem [#allocation9], 2
          %583 = sst [smem:[%s582]] %s581
        $region40: #{tpu_custom_call.1} parent=31 // pred_fallthru
          _
        %s584 = sand.u32 %s101, 1
        %s585 = scalar_lea.sflag [#allocation5], %s584
        %s586 = sand.u32 %s101, 1
        %s587 = smul.addr %s586, 8
        %s588 = scalar_lea.vmem [#allocation4], %s587
        %p589 = scmp.lt.s32.totalorder %s25, 1
        %s590 = scalar_select %p589, %s25, 1
        %s591 = smul.addr %s590, 8
        %s592 = scalar_lea.vmem %s4, %s591
        %s593 = sand.u32 %s153, 1
        %s594 = scalar_lea.sflag [#allocation8], %s593
        %s595 = sand.u32 %s153, 1
        %s596 = smul.addr %s595, 8
        %s597 = scalar_lea.vmem [#allocation7], %s596
        // Predicated region
        $region41: #{tpu_custom_call.1} parent=31 // pred_check
          %p598 = pneg %p111
        $region42: #{tpu_custom_call.1} parent=31 // pred_check_branch
          %600 = sbr.rel (%p598) target = $region44
        $region43: #{tpu_custom_call.1} parent=31 // pred_region
          %s602 = ssub.s32 128, 128
          %603 = vsyncadd %s585, %s602
          %s604 = smul.addr %s25, 128
          %s605 = scalar_lea.hbm %s3, %s604
          %s607 = sshll.u32 %s588, 4
          %s608 = int_to_ptr.vmem [resolvable:$true] %s607
          %610 = dma.vmem_to_hbm [thread:$0]  %s608, 128, %s605, %s585
        $region44: #{tpu_custom_call.1} parent=31 // pred_fallthru
          _
        // Predicated region
        $region45: #{tpu_custom_call.1} parent=31 // pred_check
          %p611 = pneg %p137
        $region46: #{tpu_custom_call.1} parent=31 // pred_check_branch
          %613 = sbr.rel (%p611) target = $region48
        $region47: #{tpu_custom_call.1} parent=31 // pred_region
          _
        $region48: #{tpu_custom_call.1} parent=31 // pred_fallthru
          _
        // Predicated region
        $region49: #{tpu_custom_call.1} parent=31 // pred_check
          %p614 = pneg %p163
        $region50: #{tpu_custom_call.1} parent=31 // pred_check_branch
          %616 = sbr.rel (%p614) target = $region52
        $region51: #{tpu_custom_call.1} parent=31 // pred_region
          %s618 = ssub.s32 128, 128
          %619 = vsyncadd %s594, %s618
          %s620 = smul.addr %s25, 128
          %s621 = scalar_lea.hbm %s5, %s620
          %s623 = sshll.u32 %s597, 4
          %s624 = int_to_ptr.vmem [resolvable:$true] %s623
          %626 = dma.vmem_to_hbm [thread:$0]  %s624, 128, %s621, %s594
        $region52: #{tpu_custom_call.1} parent=31 // pred_fallthru
          _
        // Predicated region
        $region53: #{tpu_custom_call.1} parent=31 // pred_check
          %p627 = pneg %p184
        $region54: #{tpu_custom_call.1} parent=31 // pred_check_branch
          %629 = sbr.rel (%p627) target = $region56
        $region55: #{tpu_custom_call.1} parent=31 // pred_region
          %s631 = ssub.s32 16, 16
          %632 = vsyncadd [#allocation6], %s631
          %635 = dma.smem_to_hbm [#allocation9], 16, %s6, [#allocation6]
        $region56: #{tpu_custom_call.1} parent=31 // pred_fallthru
          _
        // Predicated region
        $region57: #{tpu_custom_call.1} parent=31 // pred_check
          %p636 = pneg %p184
        $region58: #{tpu_custom_call.1} parent=31 // pred_check_branch
          %638 = sbr.rel (%p636) target = $region60
        $region59: #{tpu_custom_call.1} parent=31 // pred_region
          %639 = dma.done [#allocation6], 16
        $region60: #{tpu_custom_call.1} parent=31 // pred_fallthru
          _
        %640 = sfence
      $region32: #{tpu_custom_call.1} parent=5 // pred_fallthru
        _
      %p641 = scmp.le.s32.totalorder 2, %s20
      // Predicated region
      $region61: #{tpu_custom_call.1} parent=5 // pred_check
        %p642 = pneg %p641
      $region62: #{tpu_custom_call.1} parent=5 // pred_check_branch
        %644 = sbr.rel (%p642) target = $region64
      $region63: #{tpu_custom_call.1} parent=5 // pred_region
        %s645 = ssub.s32 %s20, 2
        // Predicated region
        $region65: #{tpu_custom_call.1} parent=63 // pred_check
          %p646 = pneg %p117
        $region66: #{tpu_custom_call.1} parent=63 // pred_check_branch
          %648 = sbr.rel (%p646) target = $region68
        $region67: #{tpu_custom_call.1} parent=63 // pred_region
          %s649 = sand.u32 %s102, 1
          %s650 = scalar_lea.sflag [#allocation5], %s649
          %s651 = sand.u32 %s102, 1
          %s652 = smul.addr %s651, 8
          %s653 = scalar_lea.vmem [#allocation4], %s652
          %654 = dma.done %s650, 128
        $region68: #{tpu_custom_call.1} parent=63 // pred_fallthru
          _
        // Predicated region
        $region69: #{tpu_custom_call.1} parent=63 // pred_check
          %p655 = pneg %p143
        $region70: #{tpu_custom_call.1} parent=63 // pred_check_branch
          %657 = sbr.rel (%p655) target = $region72
        $region71: #{tpu_custom_call.1} parent=63 // pred_region
          %p658 = scmp.lt.s32.totalorder %s26, 1
          %s659 = scalar_select %p658, %s26, 1
          %s660 = smul.addr %s659, 8
          %s661 = scalar_lea.vmem %s4, %s660
        $region72: #{tpu_custom_call.1} parent=63 // pred_fallthru
          _
        // Predicated region
        $region73: #{tpu_custom_call.1} parent=63 // pred_check
          %p662 = pneg %p169
        $region74: #{tpu_custom_call.1} parent=63 // pred_check_branch
          %664 = sbr.rel (%p662) target = $region76
        $region75: #{tpu_custom_call.1} parent=63 // pred_region
          %s665 = sand.u32 %s154, 1
          %s666 = scalar_lea.sflag [#allocation8], %s665
          %s667 = sand.u32 %s154, 1
          %s668 = smul.addr %s667, 8
          %s669 = scalar_lea.vmem [#allocation7], %s668
          %670 = dma.done %s666, 128
        $region76: #{tpu_custom_call.1} parent=63 // pred_fallthru
          _
      $region64: #{tpu_custom_call.1} parent=5 // pred_fallthru
        _
    $region6: #{tpu_custom_call.1} parent=1 // loop_footer
      %s24 = sadd.s32 1, %s20
    $region7: #{tpu_custom_call.1} parent=1 // loop_footer_branch
      %19 = sbr.rel target = $region3
    $region8: #{tpu_custom_call.1} parent=1 // loop_exit
      _
    %671 = vsyncpa [#allocation5], 1
    %s672 = scalar_lea.sflag [#allocation5], 1
    %673 = vsyncpa %s672, 1
    %674 = vsyncpa [#allocation8], 1
    %s675 = scalar_lea.sflag [#allocation8], 1
    %676 = vsyncpa %s675, 1
    %677 = vsyncpa [#allocation6], 1
    %s678 = scalar_lea.sflag [#allocation6], 1
    %679 = vsyncpa %s678, 1

</llo_original>
